<compile_context>
chip_gen: v5e
topology: v5e:2x2
jax: 0.10.0
libtpu: 0.0.40
codegen_flags: <defaults>
</compile_context>

<pallas_src>
import functools

import jax
import jax.numpy as jnp
from jax.experimental import pallas as pl
from jax.experimental.pallas import tpu as pltpu


# ----------------------------------------------------------------------------
# helpers
# ----------------------------------------------------------------------------
_SUBLANE = 16  # bf16 sublane packing for the x operand / M dimension


def _round_up(v: int, m: int) -> int:
    return ((v + m - 1) // m) * m


def _query_vmem_budget() -> int:
    """Generation-aware scoped-VMEM budget (bytes) with headroom."""
    phys = 64 * 1024 * 1024  # conservative fallback (v7x physical)
    try:
        info = pltpu.get_tpu_info()
        phys = int(getattr(info, "vmem_capacity_bytes", phys))
    except Exception:
        pass
    # 60% of physical, capped at 96 MiB (v5e/v6e: ~76 MiB, v7x: ~38 MiB).
    return max(32 * 1024 * 1024, min(phys * 3 // 5, 96 * 1024 * 1024))


_VMEM_BUDGET = _query_vmem_budget()


def _pick_tile(dim: int, cap: int) -> int:
    """Largest multiple of 128 that divides `dim` (a multiple of 128) and is
    <= cap.  Uses the full dim when it fits under the cap, so non-dividing
    dims like 640 do not collapse to 128-wide tiles."""
    t = (min(dim, cap) // 128) * 128
    while t > 128:
        if dim % t == 0:
            return t
        t -= 128
    return 128


def _vmem_bytes(tm: int, tn: int, tk: int, out_bytes: int, with_acc: bool) -> int:
    # double-buffered bf16 x / bf16 w / f32 bias / out, plus f32 acc scratch
    b = 2 * tm * tk * 2 + 2 * tk * tn * 2 + 2 * tn * 4 + 2 * tm * tn * out_bytes
    if with_acc:
        b += tm * tn * 4
    return b


# ----------------------------------------------------------------------------
# Pallas kernels
# ----------------------------------------------------------------------------
def _linear_relu_fused_kernel(x_ref, w_ref, b_ref, o_ref):
    # Whole K in one tile: no accumulator scratch, fully fused epilogue.
    acc = jnp.dot(x_ref[...], w_ref[...], preferred_element_type=jnp.float32)
    o_ref[...] = jnp.maximum(acc + b_ref[...], 0.0).astype(o_ref.dtype)


def _linear_relu_acc_kernel(x_ref, w_ref, b_ref, o_ref, acc_ref):
    # x_ref: (tm, tk) bf16   w_ref: (tk, tn) bf16
    # b_ref: (1, tn) f32     o_ref: (tm, tn)     acc_ref: (tm, tn) f32
    k = pl.program_id(2)
    part = jnp.dot(x_ref[...], w_ref[...], preferred_element_type=jnp.float32)

    @pl.when(k == 0)
    def _init():
        # Initialize with the first partial product (no zero-fill + add).
        acc_ref[...] = part

    @pl.when(k > 0)
    def _accum():
        acc_ref[...] += part

    @pl.when(k == pl.num_programs(2) - 1)
    def _epilogue():
        # bias add + ReLU + cast fused on the f32 accumulator.
        o_ref[...] = jnp.maximum(acc_ref[...] + b_ref[...], 0.0).astype(
            o_ref.dtype
        )


# ----------------------------------------------------------------------------
# wrapper: y[:n, :f_out] = relu(x @ W + b) with pre-padded bf16 W, f32 b
# ----------------------------------------------------------------------------
@functools.partial(jax.jit, static_argnums=(3, 4))
def linear_relu(x, w_p, b_p, f_out, tile_caps=None):
    """x: (n, f_in) f32/bf16; w_p: (k_p, f_p) bf16 pre-padded; b_p: (1, f_p) f32."""
    n, f_in = x.shape
    k_p, f_p = w_p.shape
    out_dtype = x.dtype
    out_bytes = jnp.dtype(out_dtype).itemsize

    budget = _VMEM_BUDGET
    if tile_caps is None:
        tm_cap, tn_cap = 1024, 1024
        tk_cap = 4096 if budget >= 64 * 1024 * 1024 else 2048
    else:
        tm_cap, tn_cap, tk_cap = tile_caps

    tk = _pick_tile(k_p, tk_cap)
    tn = _pick_tile(f_p, tn_cap)

    # Rows only need sublane alignment, not lane alignment.
    if n <= tm_cap:
        n_p = _round_up(max(n, _SUBLANE), _SUBLANE)
        tm = n_p  # single M tile (block equals full array dim)
    else:
        tm = tm_cap
        n_p = _round_up(n, tm)

    # Safety shrink loop (rarely triggers with the caps above).
    while _vmem_bytes(tm, tn, tk, out_bytes, with_acc=(tk < k_p)) > budget:
        if tk > 128 and tk >= max(tm, tn):
            tk = _pick_tile(k_p, tk - 128)
        elif tn > 128 and tn >= tm:
            tn = _pick_tile(f_p, tn - 128)
        elif tm > 128:
            if tm == n_p and n <= tm_cap:
                tm = _round_up(max(tm // 2, _SUBLANE), _SUBLANE)
            else:
                tm //= 2
            n_p = _round_up(n, tm)
        else:
            break

    # Pad x only where needed (K padding must be exact zeros for correctness).
    x_b = x.astype(jnp.bfloat16)
    if (n_p != n) or (k_p != f_in):
        x_b = jnp.pad(x_b, ((0, n_p - n), (0, k_p - f_in)))

    grid_m = n_p // tm
    grid_n = f_p // tn
    grid_k = k_p // tk

    cost = pl.CostEstimate(
        flops=2 * n_p * k_p * f_p,
        transcendentals=0,
        bytes_accessed=(
            n_p * k_p * 2 * grid_n        # x re-read once per output-col tile
            + k_p * f_p * 2 * grid_m      # w re-read once per output-row tile
            + f_p * 4 * grid_m            # bias
            + n_p * f_p * out_bytes       # output writeback
        ),
    )

    if grid_k == 1:
        # Fast path: K fits in one tile; no accumulator scratch, no K grid.
        # (For tiny layers this is a single invocation — no grid-step cost.)
        out = pl.pallas_call(
            _linear_relu_fused_kernel,
            out_shape=jax.ShapeDtypeStruct((n_p, f_p), out_dtype),
            grid=(grid_m, grid_n),
            in_specs=[
                pl.BlockSpec((tm, tk), lambda i, j: (i, 0)),   # x tile
                pl.BlockSpec((tk, tn), lambda i, j: (0, j)),   # w tile
                pl.BlockSpec((1, tn), lambda i, j: (0, j)),    # bias
            ],
            out_specs=pl.BlockSpec((tm, tn), lambda i, j: (i, j)),
            compiler_params=pltpu.CompilerParams(
                dimension_semantics=("parallel", "parallel"),
                vmem_limit_bytes=budget,
            ),
            cost_estimate=cost,
        )(x_b, w_p, b_p)
    else:
        # K-tiled path: f32 accumulator in VMEM, epilogue on last K step only.
        out = pl.pallas_call(
            _linear_relu_acc_kernel,
            out_shape=jax.ShapeDtypeStruct((n_p, f_p), out_dtype),
            grid=(grid_m, grid_n, grid_k),
            in_specs=[
                pl.BlockSpec((tm, tk), lambda i, j, k: (i, k)),   # x tile
                pl.BlockSpec((tk, tn), lambda i, j, k: (k, j)),   # w tile
                pl.BlockSpec((1, tn), lambda i, j, k: (0, j)),    # bias (K-invariant)
            ],
            out_specs=pl.BlockSpec((tm, tn), lambda i, j, k: (i, j)),
            scratch_shapes=[pltpu.VMEM((tm, tn), jnp.float32)],
            compiler_params=pltpu.CompilerParams(
                dimension_semantics=("parallel", "parallel", "arbitrary"),
                vmem_limit_bytes=budget,
            ),
            cost_estimate=cost,
        )(x_b, w_p, b_p)

    if n_p != n or f_p != f_out:
        out = out[:n, :f_out]
    return out


# ----------------------------------------------------------------------------
# Minimal phlower-like module scaffolding
# ----------------------------------------------------------------------------
class MLPCoreModule:
    """Referenced module: single Linear + ReLU, backed by the Pallas kernel.

    Weights are cast to bf16 and zero-padded to lane multiples ONCE here, so
    the forward pass does no per-call weight pad/cast traffic.
    """

    def __init__(self, f_in: int, f_out: int, key):
        kw, kb = jax.random.split(key)
        self.w = jax.random.normal(kw, (f_in, f_out), jnp.float32) * 0.1
        self.b = jax.random.normal(kb, (f_out,), jnp.float32) * 0.1
        self.f_in, self.f_out = f_in, f_out

        k_p = _round_up(f_in, 128)
        f_p = _round_up(f_out, 128)
        self.w_padded = jnp.pad(
            self.w.astype(jnp.bfloat16), ((0, k_p - f_in), (0, f_p - f_out))
        )
        self.b_padded = jnp.pad(
            self.b.astype(jnp.float32)[None, :], ((0, 0), (0, f_p - f_out))
        )

    def forward(self, data, *, field_data=None, **kwargs):
        x = data["x"]
        return linear_relu(x, self.w_padded, self.b_padded, self.f_out)


class Share:
    """Share module: no own parameters; forwards to the referenced module."""
    # TODO(synk): name-based module resolution (search_module on a readonly
    # group) is pure Python control flow, not a kernel — modeled with a dict.

    def __init__(self, reference_name: str, **kwargs):
        self._reference_name = reference_name
        self._reference = None

    @classmethod
    def get_nn_name(cls) -> str:
        return "Share"

    @classmethod
    def need_reference(cls) -> bool:
        return True

    def get_reference_name(self) -> str:
        return self._reference_name

    def resolve(self, *, parent=None, **kwargs):
        assert parent is not None
        if self._reference_name not in parent:
            raise KeyError(
                f"Reference module {self._reference_name} is not found "
                "in the same group."
            )
        self._reference = parent[self._reference_name]

    def forward(self, data, *, field_data=None, **kwargs):
        if self._reference is None:
            raise ValueError(
                "reference module in Share module is not set. "
                "Please check that `resolve` function is called."
            )
        return self._reference.forward(data, field_data=field_data, **kwargs)


# ----------------------------------------------------------------------------
if __name__ == "__main__":
    key = jax.random.PRNGKey(0)
    k_param, k_x = jax.random.split(key)

    # ---- Case 1: aligned small shapes (fast path: single pallas_call) ------
    N, F_IN, F_OUT = 256, 384, 128
    x = jax.random.normal(k_x, (N, F_IN), jnp.float32)
    data = {"x": x}

    mlp = MLPCoreModule(F_IN, F_OUT, k_param)
    group = {"MLP0": mlp}

    share = Share(reference_name="MLP0")
    share.resolve(parent=group)

    y_shared = share.forward(data)
    y_direct = mlp.forward(data)
    jax.block_until_ready(y_shared)
    jax.block_until_ready(y_direct)

    y_ref_bf16 = jnp.maximum(
        jnp.dot(
            x.astype(jnp.bfloat16),
            mlp.w.astype(jnp.bfloat16),
            preferred_element_type=jnp.float32,
        )
        + mlp.b,
        0.0,
    )
    y_ref_f32 = jnp.maximum(x @ mlp.w + mlp.b, 0.0)

    assert y_shared.shape == (N, F_OUT)
    assert jnp.array_equal(y_shared, y_direct)          # exact weight sharing
    assert jnp.allclose(y_shared, y_ref_bf16, atol=1e-3, rtol=1e-3)
    assert jnp.allclose(y_shared, y_ref_f32, atol=5e-2, rtol=5e-2)

    # ---- Case 2: unaligned shapes (M padded to 16 only, sliced back) -------
    N2, F_IN2, F_OUT2 = 200, 96, 64
    x2 = jax.random.normal(jax.random.PRNGKey(1), (N2, F_IN2), jnp.float32)
    mlp2 = MLPCoreModule(F_IN2, F_OUT2, jax.random.PRNGKey(2))
    share2 = Share(reference_name="MLP_SMALL")
    share2.resolve(parent={"MLP_SMALL": mlp2})
    y2 = share2.forward({"x": x2})
    jax.block_until_ready(y2)
    y2_ref = jnp.maximum(
        jnp.dot(
            x2.astype(jnp.bfloat16),
            mlp2.w.astype(jnp.bfloat16),
            preferred_element_type=jnp.float32,
        )
        + mlp2.b,
        0.0,
    )
    assert y2.shape == (N2, F_OUT2)
    assert jnp.allclose(y2, y2_ref, atol=1e-3, rtol=1e-3)

    # ---- Case 3: force the K-tiled accumulator kernel with tiny tile caps --
    N3, F_IN3, F_OUT3 = 128, 512, 128
    x3 = jax.random.normal(jax.random.PRNGKey(3), (N3, F_IN3), jnp.float32)
    w3 = jax.random.normal(jax.random.PRNGKey(4), (F_IN3, F_OUT3), jnp.float32) * 0.1
    b3 = jax.random.normal(jax.random.PRNGKey(5), (F_OUT3,), jnp.float32) * 0.1
    y3 = linear_relu(
        x3,
        w3.astype(jnp.bfloat16),
        b3.astype(jnp.float32)[None, :],
        F_OUT3,
        (128, 128, 128),  # tiny caps -> grid_k = 4 -> accumulator path
    )
    jax.block_until_ready(y3)
    y3_ref = jnp.maximum(
        jnp.dot(
            x3.astype(jnp.bfloat16),
            w3.astype(jnp.bfloat16),
            preferred_element_type=jnp.float32,
        )
        + b3,
        0.0,
    )
    assert y3.shape == (N3, F_OUT3)
    assert jnp.allclose(y3, y3_ref, atol=1e-3, rtol=1e-3)

    print("KERNEL_OK")
</pallas_src>

<mosaic_0001>
module attributes {stable_mosaic.version = 11 : i64} {
  func.func @_linear_relu_fused_kernel(%arg0: i32, %arg1: i32, %arg2: memref<256x384xbf16, #tpu.memory_space<vmem>>, %arg3: memref<384x128xbf16, #tpu.memory_space<vmem>>, %arg4: memref<1x128xf32, #tpu.memory_space<vmem>>, %arg5: memref<256x128xf32, #tpu.memory_space<vmem>>) attributes {dimension_semantics = [#tpu.dimension_semantics<parallel>, #tpu.dimension_semantics<parallel>], iteration_bounds = array<i64: 1, 1>, scalar_prefetch = 0 : i64, scratch_operands = 0 : i64, tpu.core_type = #tpu.core_type<tc>, window_params = [{transform_indices = @transform_0, window_bounds = array<i64: 256, 384>}, {transform_indices = @transform_1, window_bounds = array<i64: 384, 128>}, {transform_indices = @transform_2, window_bounds = array<i64: 1, 128>}, {transform_indices = @transform_3, window_bounds = array<i64: 256, 128>}]} {
    %c0 = arith.constant 0 : index
    %c0_0 = arith.constant 0 : index
    %0 = vector.load %arg2[%c0, %c0_0] : memref<256x384xbf16, #tpu.memory_space<vmem>>, vector<256x384xbf16>
    %c0_1 = arith.constant 0 : index
    %c0_2 = arith.constant 0 : index
    %1 = vector.load %arg3[%c0_1, %c0_2] : memref<384x128xbf16, #tpu.memory_space<vmem>>, vector<384x128xbf16>
    %cst = arith.constant dense<0.000000e+00> : vector<256x128xf32>
    %2 = tpu.matmul %0, %1, %cst {dimension_numbers = #tpu.dot_dimension_numbers<[1], [0], [0], [1], [0, 0, 1, 1], [], []>} : vector<256x384xbf16>, vector<384x128xbf16>, vector<256x128xf32> -> vector<256x128xf32>
    %c0_3 = arith.constant 0 : index
    %c0_4 = arith.constant 0 : index
    %3 = vector.load %arg4[%c0_3, %c0_4] : memref<1x128xf32, #tpu.memory_space<vmem>>, vector<1x128xf32>
    %4 = vector.broadcast %3 : vector<1x128xf32> to vector<256x128xf32>
    %5 = arith.addf %2, %4 : vector<256x128xf32>
    %cst_5 = arith.constant 0.000000e+00 : f32
    %6 = vector.broadcast %cst_5 : f32 to vector<256x128xf32>
    %7 = arith.maximumf %5, %6 : vector<256x128xf32>
    %c0_6 = arith.constant 0 : index
    %c0_7 = arith.constant 0 : index
    %8 = vector.load %arg5[%c0_6, %c0_7] : memref<256x128xf32, #tpu.memory_space<vmem>>, vector<256x128xf32>
    tpu.vector_store %arg5[%c0_6, %c0_7], %7 {strides = array<i32>} : memref<256x128xf32, #tpu.memory_space<vmem>>, vector<256x128xf32>,
    return
  }
  func.func @transform_0(%arg0: i32, %arg1: i32) -> (i32, i32) {
    %c0_i32 = arith.constant 0 : i32
    %c0_i32_0 = arith.constant 0 : i32
    return %arg0, %c0_i32 : i32, i32
  }
  func.func @transform_1(%arg0: i32, %arg1: i32) -> (i32, i32) {
    %c0_i32 = arith.constant 0 : i32
    %c0_i32_0 = arith.constant 0 : i32
    return %c0_i32, %arg1 : i32, i32
  }
  func.func @transform_2(%arg0: i32, %arg1: i32) -> (i32, i32) {
    %c0_i32 = arith.constant 0 : i32
    %c0_i32_0 = arith.constant 0 : i32
    return %c0_i32, %arg1 : i32, i32
  }
  func.func @transform_3(%arg0: i32, %arg1: i32) -> (i32, i32) {
    %c0_i32 = arith.constant 0 : i32
    return %arg0, %arg1 : i32, i32
  }
}

</mosaic_0001>

<llo_original>
// kernel: linear_relu.1
$region0: #{linear_relu.1}
  #allocation0 [shape = 'u32[]', space=smem, size = 0x4, offset = 0x4, fixed_abs, tag = 'smem constant byte address 0x4 - core index']
  #allocation1 [shape = 'u32[72,128]{1,0:T(1,128)}', space=vmem, size = 0x9000, scoped, tag = 'internal scratch']
  %s0 = inlined_call_operand.vmem [shape: bf16[256,384], index: 0, kind: input, shape index: {}]
  %s1 = inlined_call_operand.vmem [shape: bf16[384,128], index: 1, kind: input, shape index: {}]
  %s2 = inlined_call_operand.vmem [shape: f32[1,128], index: 2, kind: input, shape index: {}]
  %s3 = inlined_call_operand.hbm [shape: f32[256,128], index: 3, kind: output, shape index: {}]
  %s4 = sld [smem:[#allocation0]]
  $region22: #{linear_relu.1} parent=0
    _
  %s6 = ssub.s32 1, %s4
  %s7 = scalar_select 0, %s6, %s4
  $region1: #{linear_relu.1} parent=0
    #allocation2 [shape = 'u8[131072]{0}', space=vmem, size = 0x20000, scoped, tag = 'output window, operand 0, single buffered']
    #allocation3 [shape = 's32[1]{0}', space=sflag, size = 0x4, scoped, tag = 'scoped memory for linear_relu.1']
    %8 = vsyncpa [#allocation3], 0
    // Predicated region
    $region2: #{linear_relu.1} parent=1 // pred_check
      _
    $region3: #{linear_relu.1} parent=1 // pred_check_branch
      %10 = sbr.rel (0) target = $region5
    $region4: #{linear_relu.1} parent=1 // pred_region
      _
    $region5: #{linear_relu.1} parent=1 // pred_fallthru
      _
    // Predicated region
    $region6: #{linear_relu.1} parent=1 // pred_check
      _
    $region7: #{linear_relu.1} parent=1 // pred_check_branch
      %12 = sbr.rel (0) target = $region9
    $region8: #{linear_relu.1} parent=1 // pred_region
      _
    $region9: #{linear_relu.1} parent=1 // pred_fallthru
      _
    // Predicated region
    $region10: #{linear_relu.1} parent=1 // pred_check
      _
    $region11: #{linear_relu.1} parent=1 // pred_check_branch
      %14 = sbr.rel (0) target = $region13
    $region12: #{linear_relu.1} parent=1 // pred_region
      _
    $region13: #{linear_relu.1} parent=1 // pred_fallthru
      _
    %v15 = vld [vmem:[%s0] sm:$0xff]
    %v16 = vld [vmem:[%s0 + $0x8] sm:$0xf]
    %v17 = vld [vmem:[%s0 + $0xc] sm:$0xff]
    %v18 = vld [vmem:[%s0 + $0x14] sm:$0xf]
    %v19 = vld [vmem:[%s0 + $0x18] sm:$0xff]
    %v20 = vld [vmem:[%s0 + $0x20] sm:$0xf]
    %v21 = vld [vmem:[%s0 + $0x24] sm:$0xff]
    %v22 = vld [vmem:[%s0 + $0x2c] sm:$0xf]
    %v23 = vld [vmem:[%s0 + $0x30] sm:$0xff]
    %v24 = vld [vmem:[%s0 + $0x38] sm:$0xf]
    %v25 = vld [vmem:[%s0 + $0x3c] sm:$0xff]
    %v26 = vld [vmem:[%s0 + $0x44] sm:$0xf]
    %v27 = vld [vmem:[%s0 + $0x48] sm:$0xff]
    %v28 = vld [vmem:[%s0 + $0x50] sm:$0xf]
    %v29 = vld [vmem:[%s0 + $0x54] sm:$0xff]
    %v30 = vld [vmem:[%s0 + $0x5c] sm:$0xf]
    %v31 = vld [vmem:[%s0 + $0x60] sm:$0xff]
    %v32 = vld [vmem:[%s0 + $0x68] sm:$0xf]
    %v33 = vld [vmem:[%s0 + $0x6c] sm:$0xff]
    %v34 = vld [vmem:[%s0 + $0x74] sm:$0xf]
    %v35 = vld [vmem:[%s0 + $0x78] sm:$0xff]
    %v36 = vld [vmem:[%s0 + $0x80] sm:$0xf]
    %v37 = vld [vmem:[%s0 + $0x84] sm:$0xff]
    %v38 = vld [vmem:[%s0 + $0x8c] sm:$0xf]
    %v39 = vld [vmem:[%s0 + $0x90] sm:$0xff]
    %v40 = vld [vmem:[%s0 + $0x98] sm:$0xf]
    %v41 = vld [vmem:[%s0 + $0x9c] sm:$0xff]
    %v42 = vld [vmem:[%s0 + $0xa4] sm:$0xf]
    %v43 = vld [vmem:[%s0 + $0xa8] sm:$0xff]
    %v44 = vld [vmem:[%s0 + $0xb0] sm:$0xf]
    %v45 = vld [vmem:[%s0 + $0xb4] sm:$0xff]
    %v46 = vld [vmem:[%s0 + $0xbc] sm:$0xf]
    %v47 = vld [vmem:[%s0 + $0xc0] sm:$0xff]
    %v48 = vld [vmem:[%s0 + $0xc8] sm:$0xf]
    %v49 = vld [vmem:[%s0 + $0xcc] sm:$0xff]
    %v50 = vld [vmem:[%s0 + $0xd4] sm:$0xf]
    %v51 = vld [vmem:[%s0 + $0xd8] sm:$0xff]
    %v52 = vld [vmem:[%s0 + $0xe0] sm:$0xf]
    %v53 = vld [vmem:[%s0 + $0xe4] sm:$0xff]
    %v54 = vld [vmem:[%s0 + $0xec] sm:$0xf]
    %v55 = vld [vmem:[%s0 + $0xf0] sm:$0xff]
    %v56 = vld [vmem:[%s0 + $0xf8] sm:$0xf]
    %v57 = vld [vmem:[%s0 + $0xfc] sm:$0xff]
    %v58 = vld [vmem:[%s0 + $0x104] sm:$0xf]
    %v59 = vld [vmem:[%s0 + $0x108] sm:$0xff]
    %v60 = vld [vmem:[%s0 + $0x110] sm:$0xf]
    %v61 = vld [vmem:[%s0 + $0x114] sm:$0xff]
    %v62 = vld [vmem:[%s0 + $0x11c] sm:$0xf]
    %v63 = vld [vmem:[%s0 + $0x120] sm:$0xff]
    %v64 = vld [vmem:[%s0 + $0x128] sm:$0xf]
    %v65 = vld [vmem:[%s0 + $0x12c] sm:$0xff]
    %v66 = vld [vmem:[%s0 + $0x134] sm:$0xf]
    %v67 = vld [vmem:[%s0 + $0x138] sm:$0xff]
    %v68 = vld [vmem:[%s0 + $0x140] sm:$0xf]
    %v69 = vld [vmem:[%s0 + $0x144] sm:$0xff]
    %v70 = vld [vmem:[%s0 + $0x14c] sm:$0xf]
    %v71 = vld [vmem:[%s0 + $0x150] sm:$0xff]
    %v72 = vld [vmem:[%s0 + $0x158] sm:$0xf]
    %v73 = vld [vmem:[%s0 + $0x15c] sm:$0xff]
    %v74 = vld [vmem:[%s0 + $0x164] sm:$0xf]
    %v75 = vld [vmem:[%s0 + $0x168] sm:$0xff]
    %v76 = vld [vmem:[%s0 + $0x170] sm:$0xf]
    %v77 = vld [vmem:[%s0 + $0x174] sm:$0xff]
    %v78 = vld [vmem:[%s0 + $0x17c] sm:$0xf]
    %v79 = vld [vmem:[%s1] sm:$0xf]
    %v80 = vld [vmem:[%s1 + $0x4] sm:$0xf]
    %v81 = vld [vmem:[%s1 + $0x8] sm:$0xf]
    %v82 = vld [vmem:[%s1 + $0xc] sm:$0xf]
    %v83 = vld [vmem:[%s1 + $0x10] sm:$0xf]
    %v84 = vld [vmem:[%s1 + $0x14] sm:$0xf]
    %v85 = vld [vmem:[%s1 + $0x18] sm:$0xf]
    %v86 = vld [vmem:[%s1 + $0x1c] sm:$0xf]
    %v87 = vld [vmem:[%s1 + $0x20] sm:$0xf]
    %v88 = vld [vmem:[%s1 + $0x24] sm:$0xf]
    %v89 = vld [vmem:[%s1 + $0x28] sm:$0xf]
    %v90 = vld [vmem:[%s1 + $0x2c] sm:$0xf]
    %v91 = vld [vmem:[%s1 + $0x30] sm:$0xf]
    %v92 = vld [vmem:[%s1 + $0x34] sm:$0xf]
    %v93 = vld [vmem:[%s1 + $0x38] sm:$0xf]
    %v94 = vld [vmem:[%s1 + $0x3c] sm:$0xf]
    %v95 = vld [vmem:[%s1 + $0x40] sm:$0xf]
    %v96 = vld [vmem:[%s1 + $0x44] sm:$0xf]
    %v97 = vld [vmem:[%s1 + $0x48] sm:$0xf]
    %v98 = vld [vmem:[%s1 + $0x4c] sm:$0xf]
    %v99 = vld [vmem:[%s1 + $0x50] sm:$0xf]
    %v100 = vld [vmem:[%s1 + $0x54] sm:$0xf]
    %v101 = vld [vmem:[%s1 + $0x58] sm:$0xf]
    %v102 = vld [vmem:[%s1 + $0x5c] sm:$0xf]
    %v103 = vld [vmem:[%s1 + $0x60] sm:$0xf]
    %v104 = vld [vmem:[%s1 + $0x64] sm:$0xf]
    %v105 = vld [vmem:[%s1 + $0x68] sm:$0xf]
    %v106 = vld [vmem:[%s1 + $0x6c] sm:$0xf]
    %v107 = vld [vmem:[%s1 + $0x70] sm:$0xf]
    %v108 = vld [vmem:[%s1 + $0x74] sm:$0xf]
    %v109 = vld [vmem:[%s1 + $0x78] sm:$0xf]
    %v110 = vld [vmem:[%s1 + $0x7c] sm:$0xf]
    %v111 = vld [vmem:[%s1 + $0x80] sm:$0xf]
    %v112 = vld [vmem:[%s1 + $0x84] sm:$0xf]
    %v113 = vld [vmem:[%s1 + $0x88] sm:$0xf]
    %v114 = vld [vmem:[%s1 + $0x8c] sm:$0xf]
    %v115 = vld [vmem:[%s1 + $0x90] sm:$0xf]
    %v116 = vld [vmem:[%s1 + $0x94] sm:$0xf]
    %v117 = vld [vmem:[%s1 + $0x98] sm:$0xf]
    %v118 = vld [vmem:[%s1 + $0x9c] sm:$0xf]
    %v119 = vld [vmem:[%s1 + $0xa0] sm:$0xf]
    %v120 = vld [vmem:[%s1 + $0xa4] sm:$0xf]
    %v121 = vld [vmem:[%s1 + $0xa8] sm:$0xf]
    %v122 = vld [vmem:[%s1 + $0xac] sm:$0xf]
    %v123 = vld [vmem:[%s1 + $0xb0] sm:$0xf]
    %v124 = vld [vmem:[%s1 + $0xb4] sm:$0xf]
    %v125 = vld [vmem:[%s1 + $0xb8] sm:$0xf]
    %v126 = vld [vmem:[%s1 + $0xbc] sm:$0xf]
    %v127 = vld [vmem:[%s2] sm:$0x1]
    %v129 = vperm.slane %v127, 0
    %v195 = vunpack.c.l.b16 %v15
    %v196 = vunpack.c.h.b16 %v15
    %v197 = vunpack.c.l.b16 %v16
    %v198 = vunpack.c.l.b16 %v17
    %v199 = vunpack.c.h.b16 %v17
    %v200 = vunpack.c.l.b16 %v18
    %v201 = vunpack.c.l.b16 %v19
    %v202 = vunpack.c.h.b16 %v19
    %v203 = vunpack.c.l.b16 %v20
    %v204 = vunpack.c.l.b16 %v21
    %v205 = vunpack.c.h.b16 %v21
    %v206 = vunpack.c.l.b16 %v22
    %v207 = vunpack.c.l.b16 %v23
    %v208 = vunpack.c.h.b16 %v23
    %v209 = vunpack.c.l.b16 %v24
    %v210 = vunpack.c.l.b16 %v25
    %v211 = vunpack.c.h.b16 %v25
    %v212 = vunpack.c.l.b16 %v26
    %v213 = vunpack.c.l.b16 %v27
    %v214 = vunpack.c.h.b16 %v27
    %v215 = vunpack.c.l.b16 %v28
    %v216 = vunpack.c.l.b16 %v29
    %v217 = vunpack.c.h.b16 %v29
    %v218 = vunpack.c.l.b16 %v30
    %v219 = vunpack.c.l.b16 %v31
    %v220 = vunpack.c.h.b16 %v31
    %v221 = vunpack.c.l.b16 %v32
    %v222 = vunpack.c.l.b16 %v33
    %v223 = vunpack.c.h.b16 %v33
    %v224 = vunpack.c.l.b16 %v34
    %v225 = vunpack.c.l.b16 %v35
    %v226 = vunpack.c.h.b16 %v35
    %v227 = vunpack.c.l.b16 %v36
    %v228 = vunpack.c.l.b16 %v37
    %v229 = vunpack.c.h.b16 %v37
    %v230 = vunpack.c.l.b16 %v38
    %v231 = vunpack.c.l.b16 %v39
    %v232 = vunpack.c.h.b16 %v39
    %v233 = vunpack.c.l.b16 %v40
    %v234 = vunpack.c.l.b16 %v41
    %v235 = vunpack.c.h.b16 %v41
    %v236 = vunpack.c.l.b16 %v42
    %v237 = vunpack.c.l.b16 %v43
    %v238 = vunpack.c.h.b16 %v43
    %v239 = vunpack.c.l.b16 %v44
    %v240 = vunpack.c.l.b16 %v45
    %v241 = vunpack.c.h.b16 %v45
    %v242 = vunpack.c.l.b16 %v46
    %v243 = vunpack.c.l.b16 %v47
    %v244 = vunpack.c.h.b16 %v47
    %v245 = vunpack.c.l.b16 %v48
    %v246 = vunpack.c.l.b16 %v49
    %v247 = vunpack.c.h.b16 %v49
    %v248 = vunpack.c.l.b16 %v50
    %v249 = vunpack.c.l.b16 %v51
    %v250 = vunpack.c.h.b16 %v51
    %v251 = vunpack.c.l.b16 %v52
    %v252 = vunpack.c.l.b16 %v53
    %v253 = vunpack.c.h.b16 %v53
    %v254 = vunpack.c.l.b16 %v54
    %v255 = vunpack.c.l.b16 %v55
    %v256 = vunpack.c.h.b16 %v55
    %v257 = vunpack.c.l.b16 %v56
    %v258 = vunpack.c.l.b16 %v57
    %v259 = vunpack.c.h.b16 %v57
    %v260 = vunpack.c.l.b16 %v58
    %v261 = vunpack.c.l.b16 %v59
    %v262 = vunpack.c.h.b16 %v59
    %v263 = vunpack.c.l.b16 %v60
    %v264 = vunpack.c.l.b16 %v61
    %v265 = vunpack.c.h.b16 %v61
    %v266 = vunpack.c.l.b16 %v62
    %v267 = vunpack.c.l.b16 %v63
    %v268 = vunpack.c.h.b16 %v63
    %v269 = vunpack.c.l.b16 %v64
    %v270 = vunpack.c.l.b16 %v65
    %v271 = vunpack.c.h.b16 %v65
    %v272 = vunpack.c.l.b16 %v66
    %v273 = vunpack.c.l.b16 %v67
    %v274 = vunpack.c.h.b16 %v67
    %v275 = vunpack.c.l.b16 %v68
    %v276 = vunpack.c.l.b16 %v69
    %v277 = vunpack.c.h.b16 %v69
    %v278 = vunpack.c.l.b16 %v70
    %v279 = vunpack.c.l.b16 %v71
    %v280 = vunpack.c.h.b16 %v71
    %v281 = vunpack.c.l.b16 %v72
    %v282 = vunpack.c.l.b16 %v73
    %v283 = vunpack.c.h.b16 %v73
    %v284 = vunpack.c.l.b16 %v74
    %v285 = vunpack.c.l.b16 %v75
    %v286 = vunpack.c.h.b16 %v75
    %v287 = vunpack.c.l.b16 %v76
    %v288 = vunpack.c.l.b16 %v77
    %v289 = vunpack.c.h.b16 %v77
    %v290 = vunpack.c.l.b16 %v78
    %v291 = vpack.c.b16 %v198, %v195
    %v292 = vpack.c.b16 %v199, %v196
    %v293 = vpack.c.b16 %v200, %v197
    %v294 = vpack.c.b16 %v204, %v201
    %v295 = vpack.c.b16 %v205, %v202
    %v296 = vpack.c.b16 %v206, %v203
    %v297 = vpack.c.b16 %v210, %v207
    %v298 = vpack.c.b16 %v211, %v208
    %v299 = vpack.c.b16 %v212, %v209
    %v300 = vpack.c.b16 %v216, %v213
    %v301 = vpack.c.b16 %v217, %v214
    %v302 = vpack.c.b16 %v218, %v215
    %v303 = vpack.c.b16 %v222, %v219
    %v304 = vpack.c.b16 %v223, %v220
    %v305 = vpack.c.b16 %v224, %v221
    %v306 = vpack.c.b16 %v228, %v225
    %v307 = vpack.c.b16 %v229, %v226
    %v308 = vpack.c.b16 %v230, %v227
    %v309 = vpack.c.b16 %v234, %v231
    %v310 = vpack.c.b16 %v235, %v232
    %v311 = vpack.c.b16 %v236, %v233
    %v312 = vpack.c.b16 %v240, %v237
    %v313 = vpack.c.b16 %v241, %v238
    %v314 = vpack.c.b16 %v242, %v239
    %v315 = vpack.c.b16 %v246, %v243
    %v316 = vpack.c.b16 %v247, %v244
    %v317 = vpack.c.b16 %v248, %v245
    %v318 = vpack.c.b16 %v252, %v249
    %v319 = vpack.c.b16 %v253, %v250
    %v320 = vpack.c.b16 %v254, %v251
    %v321 = vpack.c.b16 %v258, %v255
    %v322 = vpack.c.b16 %v259, %v256
    %v323 = vpack.c.b16 %v260, %v257
    %v324 = vpack.c.b16 %v264, %v261
    %v325 = vpack.c.b16 %v265, %v262
    %v326 = vpack.c.b16 %v266, %v263
    %v327 = vpack.c.b16 %v270, %v267
    %v328 = vpack.c.b16 %v271, %v268
    %v329 = vpack.c.b16 %v272, %v269
    %v330 = vpack.c.b16 %v276, %v273
    %v331 = vpack.c.b16 %v277, %v274
    %v332 = vpack.c.b16 %v278, %v275
    %v333 = vpack.c.b16 %v282, %v279
    %v334 = vpack.c.b16 %v283, %v280
    %v335 = vpack.c.b16 %v284, %v281
    %v336 = vpack.c.b16 %v288, %v285
    %v337 = vpack.c.b16 %v289, %v286
    %v338 = vpack.c.b16 %v290, %v287
    %v435 = vunpack.c.l.b16 %v79
    %v436 = vunpack.c.l.b16 %v80
    %v437 = vunpack.c.l.b16 %v81
    %v438 = vunpack.c.l.b16 %v82
    %v439 = vunpack.c.l.b16 %v83
    %v440 = vunpack.c.l.b16 %v84
    %v441 = vunpack.c.l.b16 %v85
    %v442 = vunpack.c.l.b16 %v86
    %v443 = vunpack.c.l.b16 %v87
    %v444 = vunpack.c.l.b16 %v88
    %v445 = vunpack.c.l.b16 %v89
    %v446 = vunpack.c.l.b16 %v90
    %v447 = vunpack.c.l.b16 %v91
    %v448 = vunpack.c.l.b16 %v92
    %v449 = vunpack.c.l.b16 %v93
    %v450 = vunpack.c.l.b16 %v94
    %v451 = vunpack.c.l.b16 %v95
    %v452 = vunpack.c.l.b16 %v96
    %v453 = vunpack.c.l.b16 %v97
    %v454 = vunpack.c.l.b16 %v98
    %v455 = vunpack.c.l.b16 %v99
    %v456 = vunpack.c.l.b16 %v100
    %v457 = vunpack.c.l.b16 %v101
    %v458 = vunpack.c.l.b16 %v102
    %v459 = vunpack.c.l.b16 %v103
    %v460 = vunpack.c.l.b16 %v104
    %v461 = vunpack.c.l.b16 %v105
    %v462 = vunpack.c.l.b16 %v106
    %v463 = vunpack.c.l.b16 %v107
    %v464 = vunpack.c.l.b16 %v108
    %v465 = vunpack.c.l.b16 %v109
    %v466 = vunpack.c.l.b16 %v110
    %v467 = vunpack.c.l.b16 %v111
    %v468 = vunpack.c.l.b16 %v112
    %v469 = vunpack.c.l.b16 %v113
    %v470 = vunpack.c.l.b16 %v114
    %v471 = vunpack.c.l.b16 %v115
    %v472 = vunpack.c.l.b16 %v116
    %v473 = vunpack.c.l.b16 %v117
    %v474 = vunpack.c.l.b16 %v118
    %v475 = vunpack.c.l.b16 %v119
    %v476 = vunpack.c.l.b16 %v120
    %v477 = vunpack.c.l.b16 %v121
    %v478 = vunpack.c.l.b16 %v122
    %v479 = vunpack.c.l.b16 %v123
    %v480 = vunpack.c.l.b16 %v124
    %v481 = vunpack.c.l.b16 %v125
    %v482 = vunpack.c.l.b16 %v126
    %v483 = vpack.c.b16 %v436, %v435
    %v484 = vpack.c.b16 %v438, %v437
    %v485 = vpack.c.b16 %v440, %v439
    %v486 = vpack.c.b16 %v442, %v441
    %v487 = vpack.c.b16 %v444, %v443
    %v488 = vpack.c.b16 %v446, %v445
    %v489 = vpack.c.b16 %v448, %v447
    %v490 = vpack.c.b16 %v450, %v449
    %v491 = vpack.c.b16 %v452, %v451
    %v492 = vpack.c.b16 %v454, %v453
    %v493 = vpack.c.b16 %v456, %v455
    %v494 = vpack.c.b16 %v458, %v457
    %v495 = vpack.c.b16 %v460, %v459
    %v496 = vpack.c.b16 %v462, %v461
    %v497 = vpack.c.b16 %v464, %v463
    %v498 = vpack.c.b16 %v466, %v465
    %v499 = vpack.c.b16 %v468, %v467
    %v500 = vpack.c.b16 %v470, %v469
    %v501 = vpack.c.b16 %v472, %v471
    %v502 = vpack.c.b16 %v474, %v473
    %v503 = vpack.c.b16 %v476, %v475
    %v504 = vpack.c.b16 %v478, %v477
    %v505 = vpack.c.b16 %v480, %v479
    %v506 = vpack.c.b16 %v482, %v481
    %531 = vmatpush.bf16.msra.mxu0 %v490
    %532 = vmatpush.bf16.msra.mxu0 %v489
    %533 = vmatpush.bf16.msra.mxu0 %v488
    %534 = vmatpush.bf16.msra.mxu0 %v487
    %535 = vmatpush.bf16.msra.mxu0 %v486
    %536 = vmatpush.bf16.msra.mxu0 %v485
    %537 = vmatpush.bf16.msra.mxu0 %v484
    %538 = vmatpush.bf16.msra.mxu0 %v483
    %539 = vmatmul.bf16.gmra.mxu0 %v291
    %v540 = vpop.f32.mrf.mxu0
    %v541 = vadd.f32 %v129, %v540
    %v542 = vpop.f32.mrf.mxu0
    %v543 = vadd.f32 %v129, %v542
    %544 = vmatmul.bf16.gmra.mxu0 %v294
    %v545 = vpop.f32.mrf.mxu0
    %v546 = vadd.f32 %v129, %v545
    %v547 = vpop.f32.mrf.mxu0
    %v548 = vadd.f32 %v129, %v547
    %549 = vmatmul.bf16.gmra.mxu0 %v297
    %v550 = vpop.f32.mrf.mxu0
    %v551 = vadd.f32 %v129, %v550
    %v552 = vpop.f32.mrf.mxu0
    %v553 = vadd.f32 %v129, %v552
    %554 = vmatmul.bf16.gmra.mxu0 %v300
    %v555 = vpop.f32.mrf.mxu0
    %v556 = vadd.f32 %v129, %v555
    %v557 = vpop.f32.mrf.mxu0
    %v558 = vadd.f32 %v129, %v557
    %559 = vmatmul.bf16.gmra.mxu0 %v303
    %v560 = vpop.f32.mrf.mxu0
    %v561 = vadd.f32 %v129, %v560
    %v562 = vpop.f32.mrf.mxu0
    %v563 = vadd.f32 %v129, %v562
    %564 = vmatmul.bf16.gmra.mxu0 %v306
    %v565 = vpop.f32.mrf.mxu0
    %v566 = vadd.f32 %v129, %v565
    %v567 = vpop.f32.mrf.mxu0
    %v568 = vadd.f32 %v129, %v567
    %569 = vmatmul.bf16.gmra.mxu0 %v309
    %v570 = vpop.f32.mrf.mxu0
    %v571 = vadd.f32 %v129, %v570
    %v572 = vpop.f32.mrf.mxu0
    %v573 = vadd.f32 %v129, %v572
    %574 = vmatmul.bf16.gmra.mxu0 %v312
    %v575 = vpop.f32.mrf.mxu0
    %v576 = vadd.f32 %v129, %v575
    %v577 = vpop.f32.mrf.mxu0
    %v578 = vadd.f32 %v129, %v577
    %579 = vmatmul.bf16.gmra.mxu0 %v315
    %v580 = vpop.f32.mrf.mxu0
    %v581 = vadd.f32 %v129, %v580
    %v582 = vpop.f32.mrf.mxu0
    %v583 = vadd.f32 %v129, %v582
    %584 = vmatmul.bf16.gmra.mxu0 %v318
    %v585 = vpop.f32.mrf.mxu0
    %v586 = vadd.f32 %v129, %v585
    %v587 = vpop.f32.mrf.mxu0
    %v588 = vadd.f32 %v129, %v587
    %589 = vmatmul.bf16.gmra.mxu0 %v321
    %v590 = vpop.f32.mrf.mxu0
    %v591 = vadd.f32 %v129, %v590
    %v592 = vpop.f32.mrf.mxu0
    %v593 = vadd.f32 %v129, %v592
    %594 = vmatmul.bf16.gmra.mxu0 %v324
    %v595 = vpop.f32.mrf.mxu0
    %v596 = vadd.f32 %v129, %v595
    %v597 = vpop.f32.mrf.mxu0
    %v598 = vadd.f32 %v129, %v597
    %599 = vmatmul.bf16.gmra.mxu0 %v327
    %v600 = vpop.f32.mrf.mxu0
    %v601 = vadd.f32 %v129, %v600
    %v602 = vpop.f32.mrf.mxu0
    %v603 = vadd.f32 %v129, %v602
    %604 = vmatmul.bf16.gmra.mxu0 %v330
    %v605 = vpop.f32.mrf.mxu0
    %v606 = vadd.f32 %v129, %v605
    %v607 = vpop.f32.mrf.mxu0
    %v608 = vadd.f32 %v129, %v607
    %609 = vmatmul.bf16.gmra.mxu0 %v333
    %v610 = vpop.f32.mrf.mxu0
    %v611 = vadd.f32 %v129, %v610
    %v612 = vpop.f32.mrf.mxu0
    %v613 = vadd.f32 %v129, %v612
    %614 = vmatmul.bf16.gmra.mxu0 %v336
    %v615 = vpop.f32.mrf.mxu0
    %v616 = vadd.f32 %v129, %v615
    %v617 = vpop.f32.mrf.mxu0
    %v618 = vadd.f32 %v129, %v617
    %619 = vdwg.mxu0
    %620 = vmatpush.bf16.msra.mxu0 %v498
    %621 = vmatpush.bf16.msra.mxu0 %v497
    %622 = vmatpush.bf16.msra.mxu0 %v496
    %623 = vmatpush.bf16.msra.mxu0 %v495
    %624 = vmatpush.bf16.msra.mxu0 %v494
    %625 = vmatpush.bf16.msra.mxu0 %v493
    %626 = vmatpush.bf16.msra.mxu0 %v492
    %627 = vmatpush.bf16.msra.mxu0 %v491
    %628 = vmatmul.bf16.gmra.mxu0 %v292
    %v629 = vpop.f32.mrf.mxu0
    %v630 = vadd.f32 %v541, %v629
    %v631 = vpop.f32.mrf.mxu0
    %v632 = vadd.f32 %v543, %v631
    %633 = vmatmul.bf16.gmra.mxu0 %v295
    %v634 = vpop.f32.mrf.mxu0
    %v635 = vadd.f32 %v546, %v634
    %v636 = vpop.f32.mrf.mxu0
    %v637 = vadd.f32 %v548, %v636
    %638 = vmatmul.bf16.gmra.mxu0 %v298
    %v639 = vpop.f32.mrf.mxu0
    %v640 = vadd.f32 %v551, %v639
    %v641 = vpop.f32.mrf.mxu0
    %v642 = vadd.f32 %v553, %v641
    %643 = vmatmul.bf16.gmra.mxu0 %v301
    %v644 = vpop.f32.mrf.mxu0
    %v645 = vadd.f32 %v556, %v644
    %v646 = vpop.f32.mrf.mxu0
    %v647 = vadd.f32 %v558, %v646
    %648 = vmatmul.bf16.gmra.mxu0 %v304
    %v649 = vpop.f32.mrf.mxu0
    %v650 = vadd.f32 %v561, %v649
    %v651 = vpop.f32.mrf.mxu0
    %v652 = vadd.f32 %v563, %v651
    %653 = vmatmul.bf16.gmra.mxu0 %v307
    %v654 = vpop.f32.mrf.mxu0
    %v655 = vadd.f32 %v566, %v654
    %v656 = vpop.f32.mrf.mxu0
    %v657 = vadd.f32 %v568, %v656
    %658 = vmatmul.bf16.gmra.mxu0 %v310
    %v659 = vpop.f32.mrf.mxu0
    %v660 = vadd.f32 %v571, %v659
    %v661 = vpop.f32.mrf.mxu0
    %v662 = vadd.f32 %v573, %v661
    %663 = vmatmul.bf16.gmra.mxu0 %v313
    %v664 = vpop.f32.mrf.mxu0
    %v665 = vadd.f32 %v576, %v664
    %v666 = vpop.f32.mrf.mxu0
    %v667 = vadd.f32 %v578, %v666
    %668 = vmatmul.bf16.gmra.mxu0 %v316
    %v669 = vpop.f32.mrf.mxu0
    %v670 = vadd.f32 %v581, %v669
    %v671 = vpop.f32.mrf.mxu0
    %v672 = vadd.f32 %v583, %v671
    %673 = vmatmul.bf16.gmra.mxu0 %v319
    %v674 = vpop.f32.mrf.mxu0
    %v675 = vadd.f32 %v586, %v674
    %v676 = vpop.f32.mrf.mxu0
    %v677 = vadd.f32 %v588, %v676
    %678 = vmatmul.bf16.gmra.mxu0 %v322
    %v679 = vpop.f32.mrf.mxu0
    %v680 = vadd.f32 %v591, %v679
    %v681 = vpop.f32.mrf.mxu0
    %v682 = vadd.f32 %v593, %v681
    %683 = vmatmul.bf16.gmra.mxu0 %v325
    %v684 = vpop.f32.mrf.mxu0
    %v685 = vadd.f32 %v596, %v684
    %v686 = vpop.f32.mrf.mxu0
    %v687 = vadd.f32 %v598, %v686
    %688 = vmatmul.bf16.gmra.mxu0 %v328
    %v689 = vpop.f32.mrf.mxu0
    %v690 = vadd.f32 %v601, %v689
    %v691 = vpop.f32.mrf.mxu0
    %v692 = vadd.f32 %v603, %v691
    %693 = vmatmul.bf16.gmra.mxu0 %v331
    %v694 = vpop.f32.mrf.mxu0
    %v695 = vadd.f32 %v606, %v694
    %v696 = vpop.f32.mrf.mxu0
    %v697 = vadd.f32 %v608, %v696
    %698 = vmatmul.bf16.gmra.mxu0 %v334
    %v699 = vpop.f32.mrf.mxu0
    %v700 = vadd.f32 %v611, %v699
    %v701 = vpop.f32.mrf.mxu0
    %v702 = vadd.f32 %v613, %v701
    %703 = vmatmul.bf16.gmra.mxu0 %v337
    %v704 = vpop.f32.mrf.mxu0
    %v705 = vadd.f32 %v616, %v704
    %v706 = vpop.f32.mrf.mxu0
    %v707 = vadd.f32 %v618, %v706
    %708 = vdwg.mxu0
    %709 = vmatpush.bf16.msra.mxu0 %v506
    %710 = vmatpush.bf16.msra.mxu0 %v505
    %711 = vmatpush.bf16.msra.mxu0 %v504
    %712 = vmatpush.bf16.msra.mxu0 %v503
    %713 = vmatpush.bf16.msra.mxu0 %v502
    %714 = vmatpush.bf16.msra.mxu0 %v501
    %715 = vmatpush.bf16.msra.mxu0 %v500
    %716 = vmatpush.bf16.msra.mxu0 %v499
    %717 = vmatmul.bf16.gmra.mxu0 %v293
    %v718 = vpop.f32.mrf.mxu0
    %v719 = vadd.f32 %v630, %v718
    %v720 = vpop.f32.mrf.mxu0
    %v721 = vadd.f32 %v632, %v720
    %722 = vmatmul.bf16.gmra.mxu0 %v296
    %v723 = vpop.f32.mrf.mxu0
    %v724 = vadd.f32 %v635, %v723
    %v725 = vpop.f32.mrf.mxu0
    %v726 = vadd.f32 %v637, %v725
    %727 = vmatmul.bf16.gmra.mxu0 %v299
    %v728 = vpop.f32.mrf.mxu0
    %v729 = vadd.f32 %v640, %v728
    %v730 = vpop.f32.mrf.mxu0
    %v731 = vadd.f32 %v642, %v730
    %732 = vmatmul.bf16.gmra.mxu0 %v302
    %v733 = vpop.f32.mrf.mxu0
    %v734 = vadd.f32 %v645, %v733
    %v735 = vpop.f32.mrf.mxu0
    %v736 = vadd.f32 %v647, %v735
    %737 = vmatmul.bf16.gmra.mxu0 %v305
    %v738 = vpop.f32.mrf.mxu0
    %v739 = vadd.f32 %v650, %v738
    %v740 = vpop.f32.mrf.mxu0
    %v741 = vadd.f32 %v652, %v740
    %742 = vmatmul.bf16.gmra.mxu0 %v308
    %v743 = vpop.f32.mrf.mxu0
    %v744 = vadd.f32 %v655, %v743
    %v745 = vpop.f32.mrf.mxu0
    %v746 = vadd.f32 %v657, %v745
    %747 = vmatmul.bf16.gmra.mxu0 %v311
    %v748 = vpop.f32.mrf.mxu0
    %v749 = vadd.f32 %v660, %v748
    %v750 = vpop.f32.mrf.mxu0
    %v751 = vadd.f32 %v662, %v750
    %752 = vmatmul.bf16.gmra.mxu0 %v314
    %v753 = vpop.f32.mrf.mxu0
    %v754 = vadd.f32 %v665, %v753
    %v755 = vpop.f32.mrf.mxu0
    %v756 = vadd.f32 %v667, %v755
    %757 = vmatmul.bf16.gmra.mxu0 %v317
    %v758 = vpop.f32.mrf.mxu0
    %v759 = vadd.f32 %v670, %v758
    %v760 = vpop.f32.mrf.mxu0
    %v761 = vadd.f32 %v672, %v760
    %762 = vmatmul.bf16.gmra.mxu0 %v320
    %v763 = vpop.f32.mrf.mxu0
    %v764 = vadd.f32 %v675, %v763
    %v765 = vpop.f32.mrf.mxu0
    %v766 = vadd.f32 %v677, %v765
    %767 = vmatmul.bf16.gmra.mxu0 %v323
    %v768 = vpop.f32.mrf.mxu0
    %v769 = vadd.f32 %v680, %v768
    %v770 = vpop.f32.mrf.mxu0
    %v771 = vadd.f32 %v682, %v770
    %772 = vmatmul.bf16.gmra.mxu0 %v326
    %v773 = vpop.f32.mrf.mxu0
    %v774 = vadd.f32 %v685, %v773
    %v775 = vpop.f32.mrf.mxu0
    %v776 = vadd.f32 %v687, %v775
    %777 = vmatmul.bf16.gmra.mxu0 %v329
    %v778 = vpop.f32.mrf.mxu0
    %v779 = vadd.f32 %v690, %v778
    %v780 = vpop.f32.mrf.mxu0
    %v781 = vadd.f32 %v692, %v780
    %782 = vmatmul.bf16.gmra.mxu0 %v332
    %v783 = vpop.f32.mrf.mxu0
    %v784 = vadd.f32 %v695, %v783
    %v785 = vpop.f32.mrf.mxu0
    %v786 = vadd.f32 %v697, %v785
    %787 = vmatmul.bf16.gmra.mxu0 %v335
    %v788 = vpop.f32.mrf.mxu0
    %v789 = vadd.f32 %v700, %v788
    %v790 = vpop.f32.mrf.mxu0
    %v791 = vadd.f32 %v702, %v790
    %792 = vmatmul.bf16.gmra.mxu0 %v338
    %v793 = vpop.f32.mrf.mxu0
    %v794 = vadd.f32 %v705, %v793
    %v795 = vpop.f32.mrf.mxu0
    %v796 = vadd.f32 %v707, %v795
    %797 = vdwg.mxu0
    %v798 = vmax.f32 %v719, 0.0
    %v799 = vmax.f32 %v721, 0.0
    %v800 = vmax.f32 %v724, 0.0
    %v801 = vmax.f32 %v726, 0.0
    %v802 = vmax.f32 %v729, 0.0
    %v803 = vmax.f32 %v731, 0.0
    %v804 = vmax.f32 %v734, 0.0
    %v805 = vmax.f32 %v736, 0.0
    %v806 = vmax.f32 %v739, 0.0
    %v807 = vmax.f32 %v741, 0.0
    %v808 = vmax.f32 %v744, 0.0
    %v809 = vmax.f32 %v746, 0.0
    %v810 = vmax.f32 %v749, 0.0
    %v811 = vmax.f32 %v751, 0.0
    %v812 = vmax.f32 %v754, 0.0
    %v813 = vmax.f32 %v756, 0.0
    %v814 = vmax.f32 %v759, 0.0
    %v815 = vmax.f32 %v761, 0.0
    %v816 = vmax.f32 %v764, 0.0
    %v817 = vmax.f32 %v766, 0.0
    %v818 = vmax.f32 %v769, 0.0
    %v819 = vmax.f32 %v771, 0.0
    %v820 = vmax.f32 %v774, 0.0
    %v821 = vmax.f32 %v776, 0.0
    %v822 = vmax.f32 %v779, 0.0
    %v823 = vmax.f32 %v781, 0.0
    %v824 = vmax.f32 %v784, 0.0
    %v825 = vmax.f32 %v786, 0.0
    %v826 = vmax.f32 %v789, 0.0
    %v827 = vmax.f32 %v791, 0.0
    %v828 = vmax.f32 %v794, 0.0
    %v829 = vmax.f32 %v796, 0.0
    %830 = vst [vmem:[#allocation2] sm:$0xff] %v798
    %831 = vst [vmem:[#allocation2 + $0x8] sm:$0xff] %v799
    %832 = vst [vmem:[#allocation2 + $0x10] sm:$0xff] %v800
    %833 = vst [vmem:[#allocation2 + $0x18] sm:$0xff] %v801
    %834 = vst [vmem:[#allocation2 + $0x20] sm:$0xff] %v802
    %835 = vst [vmem:[#allocation2 + $0x28] sm:$0xff] %v803
    %836 = vst [vmem:[#allocation2 + $0x30] sm:$0xff] %v804
    %837 = vst [vmem:[#allocation2 + $0x38] sm:$0xff] %v805
    %838 = vst [vmem:[#allocation2 + $0x40] sm:$0xff] %v806
    %839 = vst [vmem:[#allocation2 + $0x48] sm:$0xff] %v807
    %840 = vst [vmem:[#allocation2 + $0x50] sm:$0xff] %v808
    %841 = vst [vmem:[#allocation2 + $0x58] sm:$0xff] %v809
    %842 = vst [vmem:[#allocation2 + $0x60] sm:$0xff] %v810
    %843 = vst [vmem:[#allocation2 + $0x68] sm:$0xff] %v811
    %844 = vst [vmem:[#allocation2 + $0x70] sm:$0xff] %v812
    %845 = vst [vmem:[#allocation2 + $0x78] sm:$0xff] %v813
    %846 = vst [vmem:[#allocation2 + $0x80] sm:$0xff] %v814
    %847 = vst [vmem:[#allocation2 + $0x88] sm:$0xff] %v815
    %848 = vst [vmem:[#allocation2 + $0x90] sm:$0xff] %v816
    %849 = vst [vmem:[#allocation2 + $0x98] sm:$0xff] %v817
    %850 = vst [vmem:[#allocation2 + $0xa0] sm:$0xff] %v818
    %851 = vst [vmem:[#allocation2 + $0xa8] sm:$0xff] %v819
    %852 = vst [vmem:[#allocation2 + $0xb0] sm:$0xff] %v820
    %853 = vst [vmem:[#allocation2 + $0xb8] sm:$0xff] %v821
    %854 = vst [vmem:[#allocation2 + $0xc0] sm:$0xff] %v822
    %855 = vst [vmem:[#allocation2 + $0xc8] sm:$0xff] %v823
    %856 = vst [vmem:[#allocation2 + $0xd0] sm:$0xff] %v824
    %857 = vst [vmem:[#allocation2 + $0xd8] sm:$0xff] %v825
    %858 = vst [vmem:[#allocation2 + $0xe0] sm:$0xff] %v826
    %859 = vst [vmem:[#allocation2 + $0xe8] sm:$0xff] %v827
    %860 = vst [vmem:[#allocation2 + $0xf0] sm:$0xff] %v828
    %861 = vst [vmem:[#allocation2 + $0xf8] sm:$0xff] %v829
    // Predicated region
    $region14: #{linear_relu.1} parent=1 // pred_check
      _
    $region15: #{linear_relu.1} parent=1 // pred_check_branch
      %863 = sbr.rel (0) target = $region17
    $region16: #{linear_relu.1} parent=1 // pred_region
      %865 = vsyncadd [#allocation3], 0
      %s866 = sshll.u32 [#allocation2], 4
      %s867 = int_to_ptr.vmem [resolvable:$true] %s866
      %s868 = sshll.u32 %s3, 4
      %s869 = int_to_ptr.hbm [resolvable:$true] %s868
      %874 = dma.vmem_to_hbm [thread:$0]  %s867, 4096, %s869, [#allocation3], 128, 128, 8
    $region17: #{linear_relu.1} parent=1 // pred_fallthru
      _
    // Predicated region
    $region18: #{linear_relu.1} parent=1 // pred_check
      _
    $region19: #{linear_relu.1} parent=1 // pred_check_branch
      %876 = sbr.rel (0) target = $region21
    $region20: #{linear_relu.1} parent=1 // pred_region
      %878 = dma.done [#allocation3], 4096
    $region21: #{linear_relu.1} parent=1 // pred_fallthru
      _
    %879 = vsyncpa [#allocation3], 1

</llo_original>
